<compile_context>
chip_gen: v5e
topology: v5e:2x2
jax: 0.10.0
libtpu: 0.0.40
codegen_flags: <defaults>
</compile_context>

<pallas_src>
import jax
import jax.numpy as jnp
from jax.experimental import pallas as pl
from jax.experimental.pallas import tpu as pltpu


def _round_up(v, m):
    return ((v + m - 1) // m) * m


def ensemble_kernel(x_ref, wf_ref, bf_ref, w2_ref, b2_ref, wc_ref, bc_ref,
                    out_ref, acc_ref):
    """Grid = (batch tiles, K tiles over F).

    Accumulates the fused (resize+sub-models+concat+fc1) contraction over K,
    then runs the tiny MLP tail + sigmoid in the k==last epilogue.
    """
    k = pl.program_id(1)

    @pl.when(k == 0)
    def _():
        acc_ref[...] = jnp.zeros_like(acc_ref)

    # Cast the streamed f32 input tile to bf16 in-register right before the
    # MXU push (no host-side pass over x).
    acc_ref[...] += jnp.dot(x_ref[...].astype(jnp.bfloat16), wf_ref[...],
                            preferred_element_type=jnp.float32)

    @pl.when(k == pl.num_programs(1) - 1)
    def _():
        h1 = jnp.maximum(acc_ref[...] + bf_ref[...], 0.0)              # ReLU(oe_fc1)
        h2 = jnp.maximum(
            jnp.dot(h1.astype(jnp.bfloat16), w2_ref[...],
                    preferred_element_type=jnp.float32) + b2_ref[...], 0.0)  # ReLU(oe_fc2)
        z = (jnp.dot(h2.astype(jnp.bfloat16), wc_ref[...],
                     preferred_element_type=jnp.float32) + bc_ref[...])      # oe_classifier
        out_ref[...] = pl.reciprocal(1.0 + jnp.exp(-z), approx=True)         # sigmoid (EUP)


def fuse_params(params, input_sizes, num_classes, C, H, W):
    """Fold resize + per-model Linear + concat + oe_fc1 into (Wfused, bfused).

    Bilinear resize with static sizes is a separable linear map: extracting the
    per-axis weight matrices by resizing identity matrices is exact, so
        fc1(concat_i(sub_i(resize_i(x)))) == x_flat @ Wfused + bfused
    up to float roundoff.  All done on the host in f32.
    """
    F = C * H * W
    wfused = jnp.zeros((F, 16), jnp.float32)
    bfused = params["bfc1"].astype(jnp.float32)
    for i, s in enumerate(input_sizes):
        r_h = jax.image.resize(jnp.eye(H, dtype=jnp.float32), (s, H), method="bilinear")
        r_w = jax.image.resize(jnp.eye(W, dtype=jnp.float32), (s, W), method="bilinear")
        sub_w = params["sub_w"][i].reshape(C, s, s, num_classes)
        # W_eff maps the ORIGINAL flattened x (NCHW row-major) to sub-model logits.
        w_eff = jnp.einsum("ph,qw,cpqk->chwk", r_h, r_w, sub_w).reshape(F, num_classes)
        blk = params["wfc1"][i * num_classes:(i + 1) * num_classes, :]    # [NC, 16]
        wfused = wfused + w_eff @ blk
        bfused = bfused + params["sub_b"][i] @ blk
    return wfused, bfused


def _choose_tiles(B, F):
    """Pick (TB, TK) from a VMEM budget instead of a fixed cap.

    x is streamed as f32 (4 B/elem).  Target ~6 MiB per input buffer so the
    double-buffered input + resident weights + lane-padded f32 intermediates
    stay under v5e's 16 MiB scoped default (and v7x's 32 MiB default / 64 MiB
    physical).
    """
    BYTES = 4
    TILE_BUDGET = 6 * 1024 * 1024
    TB_MAX = 1024                        # amortizes the ~0.35 us/grid-step overhead
    MIN_ROWS = 64

    if MIN_ROWS * F * BYTES <= TILE_BUDGET:
        TK = F                           # a full feature row fits -> no K split
    else:
        # K-tile the contraction: largest multiple-of-128 divisor of F that
        # keeps MIN_ROWS rows within budget (f32 accumulator pattern in-kernel).
        tk_cap = max(128, (TILE_BUDGET // (MIN_ROWS * BYTES)) // 128 * 128)
        start = (min(tk_cap, F) // 128) * 128
        TK = 0
        for cand in range(start, 0, -128):
            if F % cand == 0:
                TK = cand
                break
        if TK == 0:
            TK = F
            # TODO(synk): pathological F (huge and not a multiple of 128) would
            # need host-side padding of the feature axis for a ragged K split.

    TB = max(8, min(TB_MAX, (TILE_BUDGET // (TK * BYTES)) // 8 * 8))
    # v7x megacore: prefer >= 2 batch tiles so both TensorCores get work.
    if 16 <= B <= 2 * TB:
        TB = min(TB, max(8, _round_up(pl.cdiv(B, 2), 8)))
    TB = min(TB, _round_up(B, 8))
    return TB, TK


def ensemble_forward(x, params, input_sizes, num_classes):
    """x: [B, C, H, W] float32 (NCHW)."""
    B, C, H, W = x.shape
    F = C * H * W

    wfused, bfused = fuse_params(params, input_sizes, num_classes, C, H, W)

    # No extra host passes over x: reshape is a no-copy view, the bf16 cast and
    # any ragged-batch handling happen inside the pipelined kernel.
    x_flat = x.reshape(B, F)
    wfused_bf16 = wfused.astype(jnp.bfloat16)          # tiny one-time casts
    w2 = params["wfc2"].astype(jnp.bfloat16)
    wc = params["wcls"].astype(jnp.bfloat16)

    TB, TK = _choose_tiles(B, F)
    grid = (pl.cdiv(B, TB), pl.cdiv(F, TK))

    # Explicit scoped-VMEM limit: 2x f32 input tile + 2x bf16 fused-weight tile
    # + lane-padded output/accumulator + headroom (out/acc last dims pad to 128).
    est_vmem = (2 * TB * TK * 4
                + 2 * TK * 128 * 2
                + 2 * TB * 128 * 4
                + TB * 128 * 4
                + (2 << 20))
    vmem_limit = int(min(56 << 20, max(24 << 20, 2 * est_vmem)))

    out = pl.pallas_call(
        ensemble_kernel,
        out_shape=jax.ShapeDtypeStruct((B, num_classes), jnp.float32),
        grid_spec=pltpu.PrefetchScalarGridSpec(
            num_scalar_prefetch=0,
            grid=grid,
            in_specs=[
                pl.BlockSpec((TB, TK), lambda i, k: (i, k)),           # streamed x tiles (f32)
                pl.BlockSpec((TK, 16), lambda i, k: (k, 0)),           # fused fc1 weight (bf16)
                pl.BlockSpec((1, 16), lambda i, k: (0, 0)),            # fused fc1 bias (f32)
                pl.BlockSpec((16, 8), lambda i, k: (0, 0)),            # oe_fc2 weight (bf16)
                pl.BlockSpec((1, 8), lambda i, k: (0, 0)),             # oe_fc2 bias (f32)
                pl.BlockSpec((8, num_classes), lambda i, k: (0, 0)),   # oe_classifier weight (bf16)
                pl.BlockSpec((1, num_classes), lambda i, k: (0, 0)),   # oe_classifier bias (f32)
            ],
            out_specs=pl.BlockSpec((TB, num_classes), lambda i, k: (i, 0)),
            scratch_shapes=[pltpu.VMEM((TB, 16), jnp.float32)],        # fc1 accumulator
        ),
        compiler_params=pltpu.CompilerParams(
            dimension_semantics=("parallel", "arbitrary"),
            vmem_limit_bytes=vmem_limit),
    )(x_flat, wfused_bf16, bfused, w2, params["bfc2"], wc, params["bcls"])
    return out


def reference_forward(x, params, input_sizes, num_classes):
    """Pure-JAX reference (mirrors the PyTorch forward exactly)."""
    B, C, _, _ = x.shape
    outs = []
    for i, s in enumerate(input_sizes):
        xr = jax.image.resize(x, (B, C, s, s), method="bilinear").reshape(B, -1)
        outs.append(xr @ params["sub_w"][i] + params["sub_b"][i])
    cat = jnp.concatenate(outs, axis=1)                      # [B, M*NC]
    h1 = jax.nn.relu(cat @ params["wfc1"] + params["bfc1"])
    h2 = jax.nn.relu(h1 @ params["wfc2"] + params["bfc2"])
    return jax.nn.sigmoid(h2 @ params["wcls"] + params["bcls"])


def init_params(key, num_models, num_classes, input_sizes, in_channels):
    keys = jax.random.split(key, 2 * num_models + 6)
    params = {"sub_w": [], "sub_b": []}
    for i, s in enumerate(input_sizes):
        f = in_channels * s * s
        params["sub_w"].append(
            0.02 * jax.random.normal(keys[2 * i], (f, num_classes), jnp.float32))
        params["sub_b"].append(
            0.02 * jax.random.normal(keys[2 * i + 1], (1, num_classes), jnp.float32))
    k = 2 * num_models
    params["wfc1"] = 0.1 * jax.random.normal(keys[k + 0], (num_models * num_classes, 16), jnp.float32)
    params["bfc1"] = 0.1 * jax.random.normal(keys[k + 1], (1, 16), jnp.float32)
    params["wfc2"] = 0.1 * jax.random.normal(keys[k + 2], (16, 8), jnp.float32)
    params["bfc2"] = 0.1 * jax.random.normal(keys[k + 3], (1, 8), jnp.float32)
    params["wcls"] = 0.1 * jax.random.normal(keys[k + 4], (8, num_classes), jnp.float32)
    params["bcls"] = 0.1 * jax.random.normal(keys[k + 5], (1, num_classes), jnp.float32)
    return params


if __name__ == "__main__":
    key = jax.random.PRNGKey(0)
    B, C, H, W = 2, 4, 16, 16
    num_classes = 4
    input_sizes = [8, 16, 12]          # per-sub-model resize targets
    num_models = len(input_sizes)

    kx, kp = jax.random.split(key)
    x = jax.random.normal(kx, (B, C, H, W), jnp.float32)
    params = init_params(kp, num_models, num_classes, input_sizes, C)

    out = ensemble_forward(x, params, input_sizes, num_classes)
    out = jax.block_until_ready(out)

    ref = reference_forward(x, params, input_sizes, num_classes)
    assert out.shape == (B, num_classes)
    # bf16 MXU operands + approx reciprocal -> slightly looser tolerance vs f32 ref.
    assert jnp.allclose(out, ref, atol=2e-2, rtol=2e-2), (out, ref)
    print("KERNEL_OK")
</pallas_src>

<mosaic_0001>
module attributes {stable_mosaic.version = 11 : i64} {
  func.func @ensemble_kernel(%arg0: i32, %arg1: i32, %arg2: memref<8x1024xf32, #tpu.memory_space<vmem>>, %arg3: memref<1024x16xbf16, #tpu.memory_space<vmem>>, %arg4: memref<1x16xf32, #tpu.memory_space<vmem>>, %arg5: memref<16x8xbf16, #tpu.memory_space<vmem>>, %arg6: memref<1x8xf32, #tpu.memory_space<vmem>>, %arg7: memref<8x4xbf16, #tpu.memory_space<vmem>>, %arg8: memref<1x4xf32, #tpu.memory_space<vmem>>, %arg9: memref<8x4xf32, #tpu.memory_space<vmem>>, %arg10: memref<8x16xf32, #tpu.memory_space<vmem>>) attributes {dimension_semantics = [#tpu.dimension_semantics<parallel>, #tpu.dimension_semantics<arbitrary>], iteration_bounds = array<i64: 1, 1>, scalar_prefetch = 0 : i64, scratch_operands = 1 : i64, tpu.core_type = #tpu.core_type<tc>, window_params = [{transform_indices = @transform_0, window_bounds = array<i64: 8, 1024>}, {transform_indices = @transform_1, window_bounds = array<i64: 1024, 16>}, {pipeline_mode = #tpu.pipeline_mode<synchronous>, transform_indices = @transform_2, window_bounds = array<i64: 1, 16>}, {pipeline_mode = #tpu.pipeline_mode<synchronous>, transform_indices = @transform_3, window_bounds = array<i64: 16, 8>}, {pipeline_mode = #tpu.pipeline_mode<synchronous>, transform_indices = @transform_4, window_bounds = array<i64: 1, 8>}, {pipeline_mode = #tpu.pipeline_mode<synchronous>, transform_indices = @transform_5, window_bounds = array<i64: 8, 4>}, {pipeline_mode = #tpu.pipeline_mode<synchronous>, transform_indices = @transform_6, window_bounds = array<i64: 1, 4>}, {transform_indices = @transform_7, window_bounds = array<i64: 8, 4>}]} {
    %c0_i32 = arith.constant 0 : i32
    %0 = arith.cmpi eq, %arg1, %c0_i32 : i32
    %1 = arith.extui %0 : i1 to i32
    %c0_i32_0 = arith.constant 0 : i32
    %2 = arith.cmpi ne, %1, %c0_i32_0 : i32
    scf.if %2 {
      %cst_10 = arith.constant 0.000000e+00 : f32
      %13 = vector.broadcast %cst_10 : f32 to vector<8x16xf32>
      %c0_11 = arith.constant 0 : index
      %c0_12 = arith.constant 0 : index
      %14 = vector.load %arg10[%c0_11, %c0_12] : memref<8x16xf32, #tpu.memory_space<vmem>>, vector<8x16xf32>
      tpu.vector_store %arg10[%c0_11, %c0_12], %13 {strides = array<i32>} : memref<8x16xf32, #tpu.memory_space<vmem>>, vector<8x16xf32>,
    } else {
    }
    %c0 = arith.constant 0 : index
    %c0_1 = arith.constant 0 : index
    %3 = vector.load %arg10[%c0, %c0_1] : memref<8x16xf32, #tpu.memory_space<vmem>>, vector<8x16xf32>
    %c0_2 = arith.constant 0 : index
    %c0_3 = arith.constant 0 : index
    %4 = vector.load %arg2[%c0_2, %c0_3] : memref<8x1024xf32, #tpu.memory_space<vmem>>, vector<8x1024xf32>
    %5 = arith.truncf %4 : vector<8x1024xf32> to vector<8x1024xbf16>
    %c0_4 = arith.constant 0 : index
    %c0_5 = arith.constant 0 : index
    %6 = vector.load %arg3[%c0_4, %c0_5] : memref<1024x16xbf16, #tpu.memory_space<vmem>>, vector<1024x16xbf16>
    %cst = arith.constant dense<0.000000e+00> : vector<8x16xf32>
    %7 = tpu.matmul %5, %6, %cst {dimension_numbers = #tpu.dot_dimension_numbers<[1], [0], [0], [1], [0, 0, 1, 1], [], []>} : vector<8x1024xbf16>, vector<1024x16xbf16>, vector<8x16xf32> -> vector<8x16xf32>
    %8 = arith.addf %3, %7 : vector<8x16xf32>
    %c0_6 = arith.constant 0 : index
    %c0_7 = arith.constant 0 : index
    %9 = vector.load %arg10[%c0_6, %c0_7] : memref<8x16xf32, #tpu.memory_space<vmem>>, vector<8x16xf32>
    tpu.vector_store %arg10[%c0_6, %c0_7], %8 {strides = array<i32>} : memref<8x16xf32, #tpu.memory_space<vmem>>, vector<8x16xf32>,
    %c0_i32_8 = arith.constant 0 : i32
    %10 = arith.cmpi eq, %arg1, %c0_i32_8 : i32
    %11 = arith.extui %10 : i1 to i32
    %c0_i32_9 = arith.constant 0 : i32
    %12 = arith.cmpi ne, %11, %c0_i32_9 : i32
    scf.if %12 {
      %c0_10 = arith.constant 0 : index
      %c0_11 = arith.constant 0 : index
      %13 = vector.load %arg10[%c0_10, %c0_11] : memref<8x16xf32, #tpu.memory_space<vmem>>, vector<8x16xf32>
      %c0_12 = arith.constant 0 : index
      %c0_13 = arith.constant 0 : index
      %14 = vector.load %arg4[%c0_12, %c0_13] : memref<1x16xf32, #tpu.memory_space<vmem>>, vector<1x16xf32>
      %15 = vector.broadcast %14 : vector<1x16xf32> to vector<8x16xf32>
      %16 = arith.addf %13, %15 : vector<8x16xf32>
      %cst_14 = arith.constant 0.000000e+00 : f32
      %17 = vector.broadcast %cst_14 : f32 to vector<8x16xf32>
      %18 = arith.maximumf %16, %17 : vector<8x16xf32>
      %19 = arith.truncf %18 : vector<8x16xf32> to vector<8x16xbf16>
      %c0_15 = arith.constant 0 : index
      %c0_16 = arith.constant 0 : index
      %20 = vector.load %arg5[%c0_15, %c0_16] : memref<16x8xbf16, #tpu.memory_space<vmem>>, vector<16x8xbf16>
      %cst_17 = arith.constant dense<0.000000e+00> : vector<8x8xf32>
      %21 = tpu.matmul %19, %20, %cst_17 {dimension_numbers = #tpu.dot_dimension_numbers<[1], [0], [0], [1], [0, 0, 1, 1], [], []>} : vector<8x16xbf16>, vector<16x8xbf16>, vector<8x8xf32> -> vector<8x8xf32>
      %c0_18 = arith.constant 0 : index
      %c0_19 = arith.constant 0 : index
      %22 = vector.load %arg6[%c0_18, %c0_19] : memref<1x8xf32, #tpu.memory_space<vmem>>, vector<1x8xf32>
      %23 = vector.broadcast %22 : vector<1x8xf32> to vector<8x8xf32>
      %24 = arith.addf %21, %23 : vector<8x8xf32>
      %cst_20 = arith.constant 0.000000e+00 : f32
      %25 = vector.broadcast %cst_20 : f32 to vector<8x8xf32>
      %26 = arith.maximumf %24, %25 : vector<8x8xf32>
      %27 = arith.truncf %26 : vector<8x8xf32> to vector<8x8xbf16>
      %c0_21 = arith.constant 0 : index
      %c0_22 = arith.constant 0 : index
      %28 = vector.load %arg7[%c0_21, %c0_22] : memref<8x4xbf16, #tpu.memory_space<vmem>>, vector<8x4xbf16>
      %cst_23 = arith.constant dense<0.000000e+00> : vector<8x4xf32>
      %29 = tpu.matmul %27, %28, %cst_23 {dimension_numbers = #tpu.dot_dimension_numbers<[1], [0], [0], [1], [0, 0, 1, 1], [], []>} : vector<8x8xbf16>, vector<8x4xbf16>, vector<8x4xf32> -> vector<8x4xf32>
      %c0_24 = arith.constant 0 : index
      %c0_25 = arith.constant 0 : index
      %30 = vector.load %arg8[%c0_24, %c0_25] : memref<1x4xf32, #tpu.memory_space<vmem>>, vector<1x4xf32>
      %31 = vector.broadcast %30 : vector<1x4xf32> to vector<8x4xf32>
      %32 = arith.addf %29, %31 : vector<8x4xf32>
      %cst_26 = arith.constant 0.000000e+00 : f32
      %33 = vector.broadcast %cst_26 : f32 to vector<8x4xf32>
      %34 = arith.subf %33, %32 : vector<8x4xf32>
      %35 = math.exp %34 : vector<8x4xf32>
      %cst_27 = arith.constant 1.000000e+00 : f32
      %36 = vector.broadcast %cst_27 : f32 to vector<8x4xf32>
      %37 = arith.addf %36, %35 : vector<8x4xf32>
      %38 = tpu.reciprocal %37 {approx = true} : vector<8x4xf32> -> vector<8x4xf32>
      %c0_28 = arith.constant 0 : index
      %c0_29 = arith.constant 0 : index
      %39 = vector.load %arg9[%c0_28, %c0_29] : memref<8x4xf32, #tpu.memory_space<vmem>>, vector<8x4xf32>
      tpu.vector_store %arg9[%c0_28, %c0_29], %38 {strides = array<i32>} : memref<8x4xf32, #tpu.memory_space<vmem>>, vector<8x4xf32>,
    } else {
    }
    return
  }
  func.func @transform_0(%arg0: i32, %arg1: i32) -> (i32, i32) {
    %c0_i32 = arith.constant 0 : i32
    return %arg0, %arg1 : i32, i32
  }
  func.func @transform_1(%arg0: i32, %arg1: i32) -> (i32, i32) {
    %c0_i32 = arith.constant 0 : i32
    %c0_i32_0 = arith.constant 0 : i32
    return %arg1, %c0_i32 : i32, i32
  }
  func.func @transform_2(%arg0: i32, %arg1: i32) -> (i32, i32) {
    %c0_i32 = arith.constant 0 : i32
    %c0_i32_0 = arith.constant 0 : i32
    %c0_i32_1 = arith.constant 0 : i32
    return %c0_i32, %c0_i32_0 : i32, i32
  }
  func.func @transform_3(%arg0: i32, %arg1: i32) -> (i32, i32) {
    %c0_i32 = arith.constant 0 : i32
    %c0_i32_0 = arith.constant 0 : i32
    %c0_i32_1 = arith.constant 0 : i32
    return %c0_i32, %c0_i32_0 : i32, i32
  }
  func.func @transform_4(%arg0: i32, %arg1: i32) -> (i32, i32) {
    %c0_i32 = arith.constant 0 : i32
    %c0_i32_0 = arith.constant 0 : i32
    %c0_i32_1 = arith.constant 0 : i32
    return %c0_i32, %c0_i32_0 : i32, i32
  }
  func.func @transform_5(%arg0: i32, %arg1: i32) -> (i32, i32) {
    %c0_i32 = arith.constant 0 : i32
    %c0_i32_0 = arith.constant 0 : i32
    %c0_i32_1 = arith.constant 0 : i32
    return %c0_i32, %c0_i32_0 : i32, i32
  }
  func.func @transform_6(%arg0: i32, %arg1: i32) -> (i32, i32) {
    %c0_i32 = arith.constant 0 : i32
    %c0_i32_0 = arith.constant 0 : i32
    %c0_i32_1 = arith.constant 0 : i32
    return %c0_i32, %c0_i32_0 : i32, i32
  }
  func.func @transform_7(%arg0: i32, %arg1: i32) -> (i32, i32) {
    %c0_i32 = arith.constant 0 : i32
    %c0_i32_0 = arith.constant 0 : i32
    return %arg0, %c0_i32 : i32, i32
  }
}

</mosaic_0001>

<llo_original>
// kernel: tpu_custom_call.1
$region0: #{tpu_custom_call.1}
  #allocation0 [shape = 'u32[]', space=smem, size = 0x4, offset = 0x4, fixed_abs, tag = 'smem constant byte address 0x4 - core index']
  #allocation1 [shape = 'u32[72,128]{1,0:T(1,128)}', space=vmem, size = 0x9000, scoped, tag = 'internal scratch']
  #allocation2 [shape = 'f32[8,16]{1,0:T(8,128)}', space=vmem, size = 0x1000, scoped, tag = 'scratch operand']
  %s0 = inlined_call_operand.vmem [shape: f32[2,1024], index: 0, kind: input, shape index: {}]
  %s1 = inlined_call_operand.vmem [shape: bf16[1024,16], index: 1, kind: input, shape index: {}]
  %s2 = inlined_call_operand.vmem [shape: f32[1,16], index: 2, kind: input, shape index: {}]
  %s3 = inlined_call_operand.vmem [shape: bf16[16,8], index: 3, kind: input, shape index: {}]
  %s4 = inlined_call_operand.vmem [shape: f32[1,8], index: 4, kind: input, shape index: {}]
  %s5 = inlined_call_operand.vmem [shape: bf16[8,4], index: 5, kind: input, shape index: {}]
  %s6 = inlined_call_operand.vmem [shape: f32[1,4], index: 6, kind: input, shape index: {}]
  %s7 = inlined_call_operand.hbm [shape: f32[2,4], index: 7, kind: output, shape index: {}]
  %s8 = sld [smem:[#allocation0]]
  $region46: #{tpu_custom_call.1} parent=0
    _
  %s10 = ssub.s32 1, %s8
  %s11 = scalar_select 0, %s10, %s8
  $region1: #{tpu_custom_call.1} parent=0
    #allocation3 [shape = 'u8[4096]{0}', space=vmem, size = 0x1000, scoped, tag = 'output window, operand 0, single buffered']
    #allocation4 [shape = 's32[1]{0}', space=sflag, size = 0x4, scoped, tag = 'scoped memory for tpu_custom_call.1']
    %12 = vsyncpa [#allocation4], 0
    // Predicated region
    $region2: #{tpu_custom_call.1} parent=1 // pred_check
      _
    $region3: #{tpu_custom_call.1} parent=1 // pred_check_branch
      %14 = sbr.rel (0) target = $region5
    $region4: #{tpu_custom_call.1} parent=1 // pred_region
      _
    $region5: #{tpu_custom_call.1} parent=1 // pred_fallthru
      _
    // Predicated region
    $region6: #{tpu_custom_call.1} parent=1 // pred_check
      _
    $region7: #{tpu_custom_call.1} parent=1 // pred_check_branch
      %16 = sbr.rel (0) target = $region9
    $region8: #{tpu_custom_call.1} parent=1 // pred_region
      _
    $region9: #{tpu_custom_call.1} parent=1 // pred_fallthru
      _
    // Predicated region
    $region10: #{tpu_custom_call.1} parent=1 // pred_check
      _
    $region11: #{tpu_custom_call.1} parent=1 // pred_check_branch
      %18 = sbr.rel (0) target = $region13
    $region12: #{tpu_custom_call.1} parent=1 // pred_region
      _
    $region13: #{tpu_custom_call.1} parent=1 // pred_fallthru
      _
    // Predicated region
    $region14: #{tpu_custom_call.1} parent=1 // pred_check
      _
    $region15: #{tpu_custom_call.1} parent=1 // pred_check_branch
      %20 = sbr.rel (0) target = $region17
    $region16: #{tpu_custom_call.1} parent=1 // pred_region
      _
    $region17: #{tpu_custom_call.1} parent=1 // pred_fallthru
      _
    // Predicated region
    $region18: #{tpu_custom_call.1} parent=1 // pred_check
      _
    $region19: #{tpu_custom_call.1} parent=1 // pred_check_branch
      %22 = sbr.rel (0) target = $region21
    $region20: #{tpu_custom_call.1} parent=1 // pred_region
      _
    $region21: #{tpu_custom_call.1} parent=1 // pred_fallthru
      _
    // Predicated region
    $region22: #{tpu_custom_call.1} parent=1 // pred_check
      _
    $region23: #{tpu_custom_call.1} parent=1 // pred_check_branch
      %24 = sbr.rel (0) target = $region25
    $region24: #{tpu_custom_call.1} parent=1 // pred_region
      _
    $region25: #{tpu_custom_call.1} parent=1 // pred_fallthru
      _
    // Predicated region
    $region26: #{tpu_custom_call.1} parent=1 // pred_check
      _
    $region27: #{tpu_custom_call.1} parent=1 // pred_check_branch
      %26 = sbr.rel (0) target = $region29
    $region28: #{tpu_custom_call.1} parent=1 // pred_region
      _
    $region29: #{tpu_custom_call.1} parent=1 // pred_fallthru
      _
    %p28 = scmp.eq.s32.totalorder 0, 0
    // Predicated region
    $region30: #{tpu_custom_call.1} parent=1 // pred_check
      %p29 = pneg %p28
    $region31: #{tpu_custom_call.1} parent=1 // pred_check_branch
      %31 = sbr.rel (%p29) target = $region33
    $region32: #{tpu_custom_call.1} parent=1 // pred_region
      %vm32 = vcmask 130048
      %33 = vst.msk [vmem:[#allocation2] sm:$0xff] %vm32, 0.0
    $region33: #{tpu_custom_call.1} parent=1 // pred_fallthru
      _
    %v34 = vld [vmem:[#allocation2] sm:$0xff]
    %v35 = vld [vmem:[%s0] sm:$0xff]
    %v36 = vld [vmem:[%s0 + $0x8] sm:$0xff]
    %v37 = vld [vmem:[%s0 + $0x10] sm:$0xff]
    %v38 = vld [vmem:[%s0 + $0x18] sm:$0xff]
    %v39 = vld [vmem:[%s0 + $0x20] sm:$0xff]
    %v40 = vld [vmem:[%s0 + $0x28] sm:$0xff]
    %v41 = vld [vmem:[%s0 + $0x30] sm:$0xff]
    %v42 = vld [vmem:[%s0 + $0x38] sm:$0xff]
    %51 = vst [vmem:[#allocation1] ss:$4 sm:$0xff] %v35
    %s52 = scalar_lea.vmem [#allocation1], 1
    %53 = vst [vmem:[%s52] ss:$4 sm:$0xff] %v37
    %s54 = scalar_lea.vmem [#allocation1], 2
    %55 = vst [vmem:[%s54] ss:$4 sm:$0xff] %v39
    %s56 = scalar_lea.vmem [#allocation1], 3
    %57 = vst [vmem:[%s56] ss:$4 sm:$0xff] %v41
    %s58 = scalar_lea.vmem [#allocation1], 32
    %59 = vst [vmem:[%s58] ss:$4 sm:$0xff] %v36
    %s60 = scalar_lea.vmem [#allocation1], 33
    %61 = vst [vmem:[%s60] ss:$4 sm:$0xff] %v38
    %s62 = scalar_lea.vmem [#allocation1], 34
    %63 = vst [vmem:[%s62] ss:$4 sm:$0xff] %v40
    %s64 = scalar_lea.vmem [#allocation1], 35
    %65 = vst [vmem:[%s64] ss:$4 sm:$0xff] %v42
    %v66 = vld.sshfl [vmem:[#allocation1] sm:$0xff pattern:$0x73625140]
    %v67 = vld.sshfl [vmem:[#allocation1 + $0x8] sm:$0xff pattern:$0x73625140]
    %v68 = vld.sshfl [vmem:[#allocation1 + $0x10] sm:$0xff pattern:$0x73625140]
    %v69 = vld.sshfl [vmem:[#allocation1 + $0x18] sm:$0xff pattern:$0x73625140]
    %v70 = vld.sshfl [vmem:[#allocation1 + $0x20] sm:$0xff pattern:$0x73625140]
    %v71 = vld.sshfl [vmem:[#allocation1 + $0x28] sm:$0xff pattern:$0x73625140]
    %v72 = vld.sshfl [vmem:[#allocation1 + $0x30] sm:$0xff pattern:$0x73625140]
    %v73 = vld.sshfl [vmem:[#allocation1 + $0x38] sm:$0xff pattern:$0x73625140]
    %v82 = vpack.c.bf16 %v66, %v66
    %v83 = vpack.c.bf16 %v67, %v67
    %v84 = vpack.c.bf16 %v68, %v68
    %v85 = vpack.c.bf16 %v69, %v69
    %v86 = vpack.c.bf16 %v70, %v70
    %v87 = vpack.c.bf16 %v71, %v71
    %v88 = vpack.c.bf16 %v72, %v72
    %v89 = vpack.c.bf16 %v73, %v73
    %v90 = vld [vmem:[%s1] sm:$0xf]
    %v91 = vld [vmem:[%s1 + $0x4] sm:$0xf]
    %v92 = vld [vmem:[%s1 + $0x8] sm:$0xf]
    %v93 = vld [vmem:[%s1 + $0xc] sm:$0xf]
    %v94 = vld [vmem:[%s1 + $0x10] sm:$0xf]
    %v95 = vld [vmem:[%s1 + $0x14] sm:$0xf]
    %v96 = vld [vmem:[%s1 + $0x18] sm:$0xf]
    %v97 = vld [vmem:[%s1 + $0x1c] sm:$0xf]
    %v98 = vld [vmem:[%s1 + $0x20] sm:$0xf]
    %v99 = vld [vmem:[%s1 + $0x24] sm:$0xf]
    %v100 = vld [vmem:[%s1 + $0x28] sm:$0xf]
    %v101 = vld [vmem:[%s1 + $0x2c] sm:$0xf]
    %v102 = vld [vmem:[%s1 + $0x30] sm:$0xf]
    %v103 = vld [vmem:[%s1 + $0x34] sm:$0xf]
    %v104 = vld [vmem:[%s1 + $0x38] sm:$0xf]
    %v105 = vld [vmem:[%s1 + $0x3c] sm:$0xf]
    %v106 = vld [vmem:[%s1 + $0x40] sm:$0xf]
    %v107 = vld [vmem:[%s1 + $0x44] sm:$0xf]
    %v108 = vld [vmem:[%s1 + $0x48] sm:$0xf]
    %v109 = vld [vmem:[%s1 + $0x4c] sm:$0xf]
    %v110 = vld [vmem:[%s1 + $0x50] sm:$0xf]
    %v111 = vld [vmem:[%s1 + $0x54] sm:$0xf]
    %v112 = vld [vmem:[%s1 + $0x58] sm:$0xf]
    %v113 = vld [vmem:[%s1 + $0x5c] sm:$0xf]
    %v114 = vld [vmem:[%s1 + $0x60] sm:$0xf]
    %v115 = vld [vmem:[%s1 + $0x64] sm:$0xf]
    %v116 = vld [vmem:[%s1 + $0x68] sm:$0xf]
    %v117 = vld [vmem:[%s1 + $0x6c] sm:$0xf]
    %v118 = vld [vmem:[%s1 + $0x70] sm:$0xf]
    %v119 = vld [vmem:[%s1 + $0x74] sm:$0xf]
    %v120 = vld [vmem:[%s1 + $0x78] sm:$0xf]
    %v121 = vld [vmem:[%s1 + $0x7c] sm:$0xf]
    %v122 = vld [vmem:[%s1 + $0x80] sm:$0xf]
    %v123 = vld [vmem:[%s1 + $0x84] sm:$0xf]
    %v124 = vld [vmem:[%s1 + $0x88] sm:$0xf]
    %v125 = vld [vmem:[%s1 + $0x8c] sm:$0xf]
    %v126 = vld [vmem:[%s1 + $0x90] sm:$0xf]
    %v127 = vld [vmem:[%s1 + $0x94] sm:$0xf]
    %v128 = vld [vmem:[%s1 + $0x98] sm:$0xf]
    %v129 = vld [vmem:[%s1 + $0x9c] sm:$0xf]
    %v130 = vld [vmem:[%s1 + $0xa0] sm:$0xf]
    %v131 = vld [vmem:[%s1 + $0xa4] sm:$0xf]
    %v132 = vld [vmem:[%s1 + $0xa8] sm:$0xf]
    %v133 = vld [vmem:[%s1 + $0xac] sm:$0xf]
    %v134 = vld [vmem:[%s1 + $0xb0] sm:$0xf]
    %v135 = vld [vmem:[%s1 + $0xb4] sm:$0xf]
    %v136 = vld [vmem:[%s1 + $0xb8] sm:$0xf]
    %v137 = vld [vmem:[%s1 + $0xbc] sm:$0xf]
    %v138 = vld [vmem:[%s1 + $0xc0] sm:$0xf]
    %v139 = vld [vmem:[%s1 + $0xc4] sm:$0xf]
    %v140 = vld [vmem:[%s1 + $0xc8] sm:$0xf]
    %v141 = vld [vmem:[%s1 + $0xcc] sm:$0xf]
    %v142 = vld [vmem:[%s1 + $0xd0] sm:$0xf]
    %v143 = vld [vmem:[%s1 + $0xd4] sm:$0xf]
    %v144 = vld [vmem:[%s1 + $0xd8] sm:$0xf]
    %v145 = vld [vmem:[%s1 + $0xdc] sm:$0xf]
    %v146 = vld [vmem:[%s1 + $0xe0] sm:$0xf]
    %v147 = vld [vmem:[%s1 + $0xe4] sm:$0xf]
    %v148 = vld [vmem:[%s1 + $0xe8] sm:$0xf]
    %v149 = vld [vmem:[%s1 + $0xec] sm:$0xf]
    %v150 = vld [vmem:[%s1 + $0xf0] sm:$0xf]
    %v151 = vld [vmem:[%s1 + $0xf4] sm:$0xf]
    %v152 = vld [vmem:[%s1 + $0xf8] sm:$0xf]
    %v153 = vld [vmem:[%s1 + $0xfc] sm:$0xf]
    %v154 = vld [vmem:[%s1 + $0x100] sm:$0xf]
    %v155 = vld [vmem:[%s1 + $0x104] sm:$0xf]
    %v156 = vld [vmem:[%s1 + $0x108] sm:$0xf]
    %v157 = vld [vmem:[%s1 + $0x10c] sm:$0xf]
    %v158 = vld [vmem:[%s1 + $0x110] sm:$0xf]
    %v159 = vld [vmem:[%s1 + $0x114] sm:$0xf]
    %v160 = vld [vmem:[%s1 + $0x118] sm:$0xf]
    %v161 = vld [vmem:[%s1 + $0x11c] sm:$0xf]
    %v162 = vld [vmem:[%s1 + $0x120] sm:$0xf]
    %v163 = vld [vmem:[%s1 + $0x124] sm:$0xf]
    %v164 = vld [vmem:[%s1 + $0x128] sm:$0xf]
    %v165 = vld [vmem:[%s1 + $0x12c] sm:$0xf]
    %v166 = vld [vmem:[%s1 + $0x130] sm:$0xf]
    %v167 = vld [vmem:[%s1 + $0x134] sm:$0xf]
    %v168 = vld [vmem:[%s1 + $0x138] sm:$0xf]
    %v169 = vld [vmem:[%s1 + $0x13c] sm:$0xf]
    %v170 = vld [vmem:[%s1 + $0x140] sm:$0xf]
    %v171 = vld [vmem:[%s1 + $0x144] sm:$0xf]
    %v172 = vld [vmem:[%s1 + $0x148] sm:$0xf]
    %v173 = vld [vmem:[%s1 + $0x14c] sm:$0xf]
    %v174 = vld [vmem:[%s1 + $0x150] sm:$0xf]
    %v175 = vld [vmem:[%s1 + $0x154] sm:$0xf]
    %v176 = vld [vmem:[%s1 + $0x158] sm:$0xf]
    %v177 = vld [vmem:[%s1 + $0x15c] sm:$0xf]
    %v178 = vld [vmem:[%s1 + $0x160] sm:$0xf]
    %v179 = vld [vmem:[%s1 + $0x164] sm:$0xf]
    %v180 = vld [vmem:[%s1 + $0x168] sm:$0xf]
    %v181 = vld [vmem:[%s1 + $0x16c] sm:$0xf]
    %v182 = vld [vmem:[%s1 + $0x170] sm:$0xf]
    %v183 = vld [vmem:[%s1 + $0x174] sm:$0xf]
    %v184 = vld [vmem:[%s1 + $0x178] sm:$0xf]
    %v185 = vld [vmem:[%s1 + $0x17c] sm:$0xf]
    %v186 = vld [vmem:[%s1 + $0x180] sm:$0xf]
    %v187 = vld [vmem:[%s1 + $0x184] sm:$0xf]
    %v188 = vld [vmem:[%s1 + $0x188] sm:$0xf]
    %v189 = vld [vmem:[%s1 + $0x18c] sm:$0xf]
    %v190 = vld [vmem:[%s1 + $0x190] sm:$0xf]
    %v191 = vld [vmem:[%s1 + $0x194] sm:$0xf]
    %v192 = vld [vmem:[%s1 + $0x198] sm:$0xf]
    %v193 = vld [vmem:[%s1 + $0x19c] sm:$0xf]
    %v194 = vld [vmem:[%s1 + $0x1a0] sm:$0xf]
    %v195 = vld [vmem:[%s1 + $0x1a4] sm:$0xf]
    %v196 = vld [vmem:[%s1 + $0x1a8] sm:$0xf]
    %v197 = vld [vmem:[%s1 + $0x1ac] sm:$0xf]
    %v198 = vld [vmem:[%s1 + $0x1b0] sm:$0xf]
    %v199 = vld [vmem:[%s1 + $0x1b4] sm:$0xf]
    %v200 = vld [vmem:[%s1 + $0x1b8] sm:$0xf]
    %v201 = vld [vmem:[%s1 + $0x1bc] sm:$0xf]
    %v202 = vld [vmem:[%s1 + $0x1c0] sm:$0xf]
    %v203 = vld [vmem:[%s1 + $0x1c4] sm:$0xf]
    %v204 = vld [vmem:[%s1 + $0x1c8] sm:$0xf]
    %v205 = vld [vmem:[%s1 + $0x1cc] sm:$0xf]
    %v206 = vld [vmem:[%s1 + $0x1d0] sm:$0xf]
    %v207 = vld [vmem:[%s1 + $0x1d4] sm:$0xf]
    %v208 = vld [vmem:[%s1 + $0x1d8] sm:$0xf]
    %v209 = vld [vmem:[%s1 + $0x1dc] sm:$0xf]
    %v210 = vld [vmem:[%s1 + $0x1e0] sm:$0xf]
    %v211 = vld [vmem:[%s1 + $0x1e4] sm:$0xf]
    %v212 = vld [vmem:[%s1 + $0x1e8] sm:$0xf]
    %v213 = vld [vmem:[%s1 + $0x1ec] sm:$0xf]
    %v214 = vld [vmem:[%s1 + $0x1f0] sm:$0xf]
    %v215 = vld [vmem:[%s1 + $0x1f4] sm:$0xf]
    %v216 = vld [vmem:[%s1 + $0x1f8] sm:$0xf]
    %v217 = vld [vmem:[%s1 + $0x1fc] sm:$0xf]
    %v346 = vunpack.c.l.b16 %v90
    %v347 = vunpack.c.l.b16 %v91
    %v348 = vunpack.c.l.b16 %v92
    %v349 = vunpack.c.l.b16 %v93
    %v350 = vunpack.c.l.b16 %v94
    %v351 = vunpack.c.l.b16 %v95
    %v352 = vunpack.c.l.b16 %v96
    %v353 = vunpack.c.l.b16 %v97
    %v354 = vunpack.c.l.b16 %v98
    %v355 = vunpack.c.l.b16 %v99
    %v356 = vunpack.c.l.b16 %v100
    %v357 = vunpack.c.l.b16 %v101
    %v358 = vunpack.c.l.b16 %v102
    %v359 = vunpack.c.l.b16 %v103
    %v360 = vunpack.c.l.b16 %v104
    %v361 = vunpack.c.l.b16 %v105
    %v362 = vunpack.c.l.b16 %v106
    %v363 = vunpack.c.l.b16 %v107
    %v364 = vunpack.c.l.b16 %v108
    %v365 = vunpack.c.l.b16 %v109
    %v366 = vunpack.c.l.b16 %v110
    %v367 = vunpack.c.l.b16 %v111
    %v368 = vunpack.c.l.b16 %v112
    %v369 = vunpack.c.l.b16 %v113
    %v370 = vunpack.c.l.b16 %v114
    %v371 = vunpack.c.l.b16 %v115
    %v372 = vunpack.c.l.b16 %v116
    %v373 = vunpack.c.l.b16 %v117
    %v374 = vunpack.c.l.b16 %v118
    %v375 = vunpack.c.l.b16 %v119
    %v376 = vunpack.c.l.b16 %v120
    %v377 = vunpack.c.l.b16 %v121
    %v378 = vunpack.c.l.b16 %v122
    %v379 = vunpack.c.l.b16 %v123
    %v380 = vunpack.c.l.b16 %v124
    %v381 = vunpack.c.l.b16 %v125
    %v382 = vunpack.c.l.b16 %v126
    %v383 = vunpack.c.l.b16 %v127
    %v384 = vunpack.c.l.b16 %v128
    %v385 = vunpack.c.l.b16 %v129
    %v386 = vunpack.c.l.b16 %v130
    %v387 = vunpack.c.l.b16 %v131
    %v388 = vunpack.c.l.b16 %v132
    %v389 = vunpack.c.l.b16 %v133
    %v390 = vunpack.c.l.b16 %v134
    %v391 = vunpack.c.l.b16 %v135
    %v392 = vunpack.c.l.b16 %v136
    %v393 = vunpack.c.l.b16 %v137
    %v394 = vunpack.c.l.b16 %v138
    %v395 = vunpack.c.l.b16 %v139
    %v396 = vunpack.c.l.b16 %v140
    %v397 = vunpack.c.l.b16 %v141
    %v398 = vunpack.c.l.b16 %v142
    %v399 = vunpack.c.l.b16 %v143
    %v400 = vunpack.c.l.b16 %v144
    %v401 = vunpack.c.l.b16 %v145
    %v402 = vunpack.c.l.b16 %v146
    %v403 = vunpack.c.l.b16 %v147
    %v404 = vunpack.c.l.b16 %v148
    %v405 = vunpack.c.l.b16 %v149
    %v406 = vunpack.c.l.b16 %v150
    %v407 = vunpack.c.l.b16 %v151
    %v408 = vunpack.c.l.b16 %v152
    %v409 = vunpack.c.l.b16 %v153
    %v410 = vunpack.c.l.b16 %v154
    %v411 = vunpack.c.l.b16 %v155
    %v412 = vunpack.c.l.b16 %v156
    %v413 = vunpack.c.l.b16 %v157
    %v414 = vunpack.c.l.b16 %v158
    %v415 = vunpack.c.l.b16 %v159
    %v416 = vunpack.c.l.b16 %v160
    %v417 = vunpack.c.l.b16 %v161
    %v418 = vunpack.c.l.b16 %v162
    %v419 = vunpack.c.l.b16 %v163
    %v420 = vunpack.c.l.b16 %v164
    %v421 = vunpack.c.l.b16 %v165
    %v422 = vunpack.c.l.b16 %v166
    %v423 = vunpack.c.l.b16 %v167
    %v424 = vunpack.c.l.b16 %v168
    %v425 = vunpack.c.l.b16 %v169
    %v426 = vunpack.c.l.b16 %v170
    %v427 = vunpack.c.l.b16 %v171
    %v428 = vunpack.c.l.b16 %v172
    %v429 = vunpack.c.l.b16 %v173
    %v430 = vunpack.c.l.b16 %v174
    %v431 = vunpack.c.l.b16 %v175
    %v432 = vunpack.c.l.b16 %v176
    %v433 = vunpack.c.l.b16 %v177
    %v434 = vunpack.c.l.b16 %v178
    %v435 = vunpack.c.l.b16 %v179
    %v436 = vunpack.c.l.b16 %v180
    %v437 = vunpack.c.l.b16 %v181
    %v438 = vunpack.c.l.b16 %v182
    %v439 = vunpack.c.l.b16 %v183
    %v440 = vunpack.c.l.b16 %v184
    %v441 = vunpack.c.l.b16 %v185
    %v442 = vunpack.c.l.b16 %v186
    %v443 = vunpack.c.l.b16 %v187
    %v444 = vunpack.c.l.b16 %v188
    %v445 = vunpack.c.l.b16 %v189
    %v446 = vunpack.c.l.b16 %v190
    %v447 = vunpack.c.l.b16 %v191
    %v448 = vunpack.c.l.b16 %v192
    %v449 = vunpack.c.l.b16 %v193
    %v450 = vunpack.c.l.b16 %v194
    %v451 = vunpack.c.l.b16 %v195
    %v452 = vunpack.c.l.b16 %v196
    %v453 = vunpack.c.l.b16 %v197
    %v454 = vunpack.c.l.b16 %v198
    %v455 = vunpack.c.l.b16 %v199
    %v456 = vunpack.c.l.b16 %v200
    %v457 = vunpack.c.l.b16 %v201
    %v458 = vunpack.c.l.b16 %v202
    %v459 = vunpack.c.l.b16 %v203
    %v460 = vunpack.c.l.b16 %v204
    %v461 = vunpack.c.l.b16 %v205
    %v462 = vunpack.c.l.b16 %v206
    %v463 = vunpack.c.l.b16 %v207
    %v464 = vunpack.c.l.b16 %v208
    %v465 = vunpack.c.l.b16 %v209
    %v466 = vunpack.c.l.b16 %v210
    %v467 = vunpack.c.l.b16 %v211
    %v468 = vunpack.c.l.b16 %v212
    %v469 = vunpack.c.l.b16 %v213
    %v470 = vunpack.c.l.b16 %v214
    %v471 = vunpack.c.l.b16 %v215
    %v472 = vunpack.c.l.b16 %v216
    %v473 = vunpack.c.l.b16 %v217
    %v474 = vpack.c.b16 %v347, %v346
    %v475 = vpack.c.b16 %v349, %v348
    %v476 = vpack.c.b16 %v351, %v350
    %v477 = vpack.c.b16 %v353, %v352
    %v478 = vpack.c.b16 %v355, %v354
    %v479 = vpack.c.b16 %v357, %v356
    %v480 = vpack.c.b16 %v359, %v358
    %v481 = vpack.c.b16 %v361, %v360
    %v482 = vpack.c.b16 %v363, %v362
    %v483 = vpack.c.b16 %v365, %v364
    %v484 = vpack.c.b16 %v367, %v366
    %v485 = vpack.c.b16 %v369, %v368
    %v486 = vpack.c.b16 %v371, %v370
    %v487 = vpack.c.b16 %v373, %v372
    %v488 = vpack.c.b16 %v375, %v374
    %v489 = vpack.c.b16 %v377, %v376
    %v490 = vpack.c.b16 %v379, %v378
    %v491 = vpack.c.b16 %v381, %v380
    %v492 = vpack.c.b16 %v383, %v382
    %v493 = vpack.c.b16 %v385, %v384
    %v494 = vpack.c.b16 %v387, %v386
    %v495 = vpack.c.b16 %v389, %v388
    %v496 = vpack.c.b16 %v391, %v390
    %v497 = vpack.c.b16 %v393, %v392
    %v498 = vpack.c.b16 %v395, %v394
    %v499 = vpack.c.b16 %v397, %v396
    %v500 = vpack.c.b16 %v399, %v398
    %v501 = vpack.c.b16 %v401, %v400
    %v502 = vpack.c.b16 %v403, %v402
    %v503 = vpack.c.b16 %v405, %v404
    %v504 = vpack.c.b16 %v407, %v406
    %v505 = vpack.c.b16 %v409, %v408
    %v506 = vpack.c.b16 %v411, %v410
    %v507 = vpack.c.b16 %v413, %v412
    %v508 = vpack.c.b16 %v415, %v414
    %v509 = vpack.c.b16 %v417, %v416
    %v510 = vpack.c.b16 %v419, %v418
    %v511 = vpack.c.b16 %v421, %v420
    %v512 = vpack.c.b16 %v423, %v422
    %v513 = vpack.c.b16 %v425, %v424
    %v514 = vpack.c.b16 %v427, %v426
    %v515 = vpack.c.b16 %v429, %v428
    %v516 = vpack.c.b16 %v431, %v430
    %v517 = vpack.c.b16 %v433, %v432
    %v518 = vpack.c.b16 %v435, %v434
    %v519 = vpack.c.b16 %v437, %v436
    %v520 = vpack.c.b16 %v439, %v438
    %v521 = vpack.c.b16 %v441, %v440
    %v522 = vpack.c.b16 %v443, %v442
    %v523 = vpack.c.b16 %v445, %v444
    %v524 = vpack.c.b16 %v447, %v446
    %v525 = vpack.c.b16 %v449, %v448
    %v526 = vpack.c.b16 %v451, %v450
    %v527 = vpack.c.b16 %v453, %v452
    %v528 = vpack.c.b16 %v455, %v454
    %v529 = vpack.c.b16 %v457, %v456
    %v530 = vpack.c.b16 %v459, %v458
    %v531 = vpack.c.b16 %v461, %v460
    %v532 = vpack.c.b16 %v463, %v462
    %v533 = vpack.c.b16 %v465, %v464
    %v534 = vpack.c.b16 %v467, %v466
    %v535 = vpack.c.b16 %v469, %v468
    %v536 = vpack.c.b16 %v471, %v470
    %v537 = vpack.c.b16 %v473, %v472
    %602 = vmatpush.bf16.msra.mxu0 %v481
    %603 = vmatpush.bf16.msra.mxu0 %v480
    %604 = vmatpush.bf16.msra.mxu0 %v479
    %605 = vmatpush.bf16.msra.mxu0 %v478
    %606 = vmatpush.bf16.msra.mxu0 %v477
    %607 = vmatpush.bf16.msra.mxu0 %v476
    %608 = vmatpush.bf16.msra.mxu0 %v475
    %609 = vmatpush.bf16.msra.mxu0 %v474
    %610 = vmatmul.bf16.gmra.mxu0 %v82
    %v611 = vpop.f32.mrf.mxu0
    %v612 = vadd.f32 0.0, %v611
    %v613 = vpop.f32.mrf.mxu0
    %614 = vdwg.mxu0
    %615 = vmatpush.bf16.msra.mxu0 %v489
    %616 = vmatpush.bf16.msra.mxu0 %v488
    %617 = vmatpush.bf16.msra.mxu0 %v487
    %618 = vmatpush.bf16.msra.mxu0 %v486
    %619 = vmatpush.bf16.msra.mxu0 %v485
    %620 = vmatpush.bf16.msra.mxu0 %v484
    %621 = vmatpush.bf16.msra.mxu0 %v483
    %622 = vmatpush.bf16.msra.mxu0 %v482
    %623 = vmatmul.bf16.gmra.mxu0 %v83
    %v624 = vpop.f32.mrf.mxu0
    %v625 = vadd.f32 %v612, %v624
    %v626 = vpop.f32.mrf.mxu0
    %627 = vdwg.mxu0
    %628 = vmatpush.bf16.msra.mxu0 %v497
    %629 = vmatpush.bf16.msra.mxu0 %v496
    %630 = vmatpush.bf16.msra.mxu0 %v495
    %631 = vmatpush.bf16.msra.mxu0 %v494
    %632 = vmatpush.bf16.msra.mxu0 %v493
    %633 = vmatpush.bf16.msra.mxu0 %v492
    %634 = vmatpush.bf16.msra.mxu0 %v491
    %635 = vmatpush.bf16.msra.mxu0 %v490
    %636 = vmatmul.bf16.gmra.mxu0 %v84
    %v637 = vpop.f32.mrf.mxu0
    %v638 = vadd.f32 %v625, %v637
    %v639 = vpop.f32.mrf.mxu0
    %640 = vdwg.mxu0
    %641 = vmatpush.bf16.msra.mxu0 %v505
    %642 = vmatpush.bf16.msra.mxu0 %v504
    %643 = vmatpush.bf16.msra.mxu0 %v503
    %644 = vmatpush.bf16.msra.mxu0 %v502
    %645 = vmatpush.bf16.msra.mxu0 %v501
    %646 = vmatpush.bf16.msra.mxu0 %v500
    %647 = vmatpush.bf16.msra.mxu0 %v499
    %648 = vmatpush.bf16.msra.mxu0 %v498
    %649 = vmatmul.bf16.gmra.mxu0 %v85
    %v650 = vpop.f32.mrf.mxu0
    %v651 = vadd.f32 %v638, %v650
    %v652 = vpop.f32.mrf.mxu0
    %653 = vdwg.mxu0
    %654 = vmatpush.bf16.msra.mxu0 %v513
    %655 = vmatpush.bf16.msra.mxu0 %v512
    %656 = vmatpush.bf16.msra.mxu0 %v511
    %657 = vmatpush.bf16.msra.mxu0 %v510
    %658 = vmatpush.bf16.msra.mxu0 %v509
    %659 = vmatpush.bf16.msra.mxu0 %v508
    %660 = vmatpush.bf16.msra.mxu0 %v507
    %661 = vmatpush.bf16.msra.mxu0 %v506
    %662 = vmatmul.bf16.gmra.mxu0 %v86
    %v663 = vpop.f32.mrf.mxu0
    %v664 = vadd.f32 %v651, %v663
    %v665 = vpop.f32.mrf.mxu0
    %666 = vdwg.mxu0
    %667 = vmatpush.bf16.msra.mxu0 %v521
    %668 = vmatpush.bf16.msra.mxu0 %v520
    %669 = vmatpush.bf16.msra.mxu0 %v519
    %670 = vmatpush.bf16.msra.mxu0 %v518
    %671 = vmatpush.bf16.msra.mxu0 %v517
    %672 = vmatpush.bf16.msra.mxu0 %v516
    %673 = vmatpush.bf16.msra.mxu0 %v515
    %674 = vmatpush.bf16.msra.mxu0 %v514
    %675 = vmatmul.bf16.gmra.mxu0 %v87
    %v676 = vpop.f32.mrf.mxu0
    %v677 = vadd.f32 %v664, %v676
    %v678 = vpop.f32.mrf.mxu0
    %679 = vdwg.mxu0
    %680 = vmatpush.bf16.msra.mxu0 %v529
    %681 = vmatpush.bf16.msra.mxu0 %v528
    %682 = vmatpush.bf16.msra.mxu0 %v527
    %683 = vmatpush.bf16.msra.mxu0 %v526
    %684 = vmatpush.bf16.msra.mxu0 %v525
    %685 = vmatpush.bf16.msra.mxu0 %v524
    %686 = vmatpush.bf16.msra.mxu0 %v523
    %687 = vmatpush.bf16.msra.mxu0 %v522
    %688 = vmatmul.bf16.gmra.mxu0 %v88
    %v689 = vpop.f32.mrf.mxu0
    %v690 = vadd.f32 %v677, %v689
    %v691 = vpop.f32.mrf.mxu0
    %692 = vdwg.mxu0
    %693 = vmatpush.bf16.msra.mxu0 %v537
    %694 = vmatpush.bf16.msra.mxu0 %v536
    %695 = vmatpush.bf16.msra.mxu0 %v535
    %696 = vmatpush.bf16.msra.mxu0 %v534
    %697 = vmatpush.bf16.msra.mxu0 %v533
    %698 = vmatpush.bf16.msra.mxu0 %v532
    %699 = vmatpush.bf16.msra.mxu0 %v531
    %700 = vmatpush.bf16.msra.mxu0 %v530
    %701 = vmatmul.bf16.gmra.mxu0 %v89
    %v702 = vpop.f32.mrf.mxu0
    %v703 = vadd.f32 %v690, %v702
    %v704 = vpop.f32.mrf.mxu0
    %705 = vdwg.mxu0
    %v706 = vadd.f32 %v34, %v703
    %vm707 = vcmask 130048
    %708 = vst.msk [vmem:[#allocation2] sm:$0xff] %vm707, %v706
    // Predicated region
    $region34: #{tpu_custom_call.1} parent=1 // pred_check
      %p709 = pneg %p28
    $region35: #{tpu_custom_call.1} parent=1 // pred_check_branch
      %711 = sbr.rel (%p709) target = $region37
    $region36: #{tpu_custom_call.1} parent=1 // pred_region
      %v712 = vld [vmem:[#allocation2] sm:$0xff]
      %v713 = vld [vmem:[%s2] sm:$0x1]
      %v715 = vperm.slane %v713, 0
      %v717 = vadd.f32 %v712, %v715
      %v718 = vmax.f32 %v717, 0.0
      %v719 = vpack.c.bf16 %v718, %v718
      %v720 = vld [vmem:[%s3] sm:$0xf]
      %v721 = vld [vmem:[%s3 + $0x4] sm:$0xf]
      %v722 = vld [vmem:[%s4] sm:$0x1]
      %v724 = vperm.slane %v722, 0
      %v728 = vunpack.c.l.b16 %v720
      %v729 = vunpack.c.l.b16 %v721
      %v730 = vpack.c.b16 %v729, %v728
      %v733 = vsel %vm707, %v719, 0
      %735 = vmatpush.bf16.msra.mxu0 0
      %736 = vmatpush.bf16.msra.mxu0 0
      %737 = vmatpush.bf16.msra.mxu0 0
      %738 = vmatpush.bf16.msra.mxu0 0
      %739 = vmatpush.bf16.msra.mxu0 0
      %740 = vmatpush.bf16.msra.mxu0 0
      %741 = vmatpush.bf16.msra.mxu0 0
      %742 = vmatpush.bf16.msra.mxu0 %v730
      %743 = vmatmul.bf16.gmra.mxu0 %v733
      %v744 = vpop.f32.mrf.mxu0
      %v745 = vadd.f32 %v724, %v744
      %v746 = vpop.f32.mrf.mxu0
      %747 = vdwg.mxu0
      %v748 = vmax.f32 %v745, 0.0
      %v749 = vpack.c.bf16 %v748, %v748
      %v750 = vld [vmem:[%s5] sm:$0xf]
      %v751 = vld [vmem:[%s6] sm:$0x1]
      %v753 = vperm.slane %v751, 0
      %vm755 = vcmask 64512
      %v757 = vsel %vm755, %v749, 0
      %vm759 = vcmask 1043456
      %v761 = vsel %vm759, %v750, 0
      %763 = vmatpush.bf16.msra.mxu0 0
      %764 = vmatpush.bf16.msra.mxu0 0
      %765 = vmatpush.bf16.msra.mxu0 0
      %766 = vmatpush.bf16.msra.mxu0 0
      %767 = vmatpush.bf16.msra.mxu0 0
      %768 = vmatpush.bf16.msra.mxu0 0
      %769 = vmatpush.bf16.msra.mxu0 0
      %770 = vmatpush.bf16.msra.mxu0 %v761
      %771 = vmatmul.bf16.gmra.mxu0 %v757
      %v772 = vpop.f32.mrf.mxu0
      %v773 = vadd.f32 %v753, %v772
      %v774 = vpop.f32.mrf.mxu0
      %775 = vdwg.mxu0
      %v776 = vsub.f32 0.0, %v773
      %v777 = vmul.f32 %v776, 1.442695
      %v778 = vpow.pop %v777
      %v779 = vadd.f32 %v778, 1.0
      %v780 = vrcp.pop %v779
      %vm781 = vcmask 31744
      %782 = vst.msk [vmem:[#allocation3] sm:$0xff] %vm781, %v780
    $region37: #{tpu_custom_call.1} parent=1 // pred_fallthru
      _
    // Predicated region
    $region38: #{tpu_custom_call.1} parent=1 // pred_check
      _
    $region39: #{tpu_custom_call.1} parent=1 // pred_check_branch
      %784 = sbr.rel (0) target = $region41
    $region40: #{tpu_custom_call.1} parent=1 // pred_region
      %786 = vsyncadd [#allocation4], 96
      %s787 = sshll.u32 [#allocation3], 4
      %s788 = int_to_ptr.vmem [resolvable:$true] %s787
      %s789 = sshll.u32 %s7, 4
      %s790 = int_to_ptr.hbm [resolvable:$true] %s789
      %795 = dma.vmem_to_hbm [thread:$0]  %s788, 32, %s790, [#allocation4], 32, 32, 2
    $region41: #{tpu_custom_call.1} parent=1 // pred_fallthru
      _
    // Predicated region
    $region42: #{tpu_custom_call.1} parent=1 // pred_check
      _
    $region43: #{tpu_custom_call.1} parent=1 // pred_check_branch
      %797 = sbr.rel (0) target = $region45
    $region44: #{tpu_custom_call.1} parent=1 // pred_region
      %799 = dma.done [#allocation4], 128
    $region45: #{tpu_custom_call.1} parent=1 // pred_fallthru
      _
    %800 = vsyncpa [#allocation4], 1

</llo_original>
